<compile_context>
chip_gen: v6e
topology: v6e:2x2x1
jax: 0.10.0
libtpu: 0.0.40
codegen_flags: <defaults>
</compile_context>

<pallas_src>
import functools

import jax
import jax.numpy as jnp
from jax.experimental import pallas as pl
from jax.experimental.pallas import tpu as pltpu

H1, H2, H3 = 128, 64, 32  # hidden widths from the PyTorch module


def _mlp_kernel(x_ref, w1_ref, b1_ref, w2_ref, b2_ref, w3_ref, b3_ref,
                w4_ref, b4_ref, o_ref):
    """Fused 4-layer MLP: bf16 MXU operands, f32 accumulation, f32 bias/ReLU."""
    x = x_ref[...]                                                   # [TILE_B, 41] f32

    h = jnp.dot(x.astype(jnp.bfloat16), w1_ref[...],
                preferred_element_type=jnp.float32)
    h = jnp.maximum(h + b1_ref[...], 0.0)                           # relu(fc1), f32

    h = jnp.dot(h.astype(jnp.bfloat16), w2_ref[...],
                preferred_element_type=jnp.float32)
    h = jnp.maximum(h + b2_ref[...], 0.0)                           # relu(fc2), f32

    h = jnp.dot(h.astype(jnp.bfloat16), w3_ref[...],
                preferred_element_type=jnp.float32)
    h = jnp.maximum(h + b3_ref[...], 0.0)                           # relu(fc3), f32

    out = jnp.dot(h.astype(jnp.bfloat16), w4_ref[...],
                  preferred_element_type=jnp.float32) + b4_ref[...]
    o_ref[...] = out.astype(o_ref.dtype)                            # fc4 (logits)


def _round_up(v, m):
    return ((v + m - 1) // m) * m


def prepare_params(params):
    """One-time conversion: weights -> bf16 MXU operands, biases -> (1, N) f32 rows."""
    w1, b1, w2, b2, w3, b3, w4, b4 = params
    return (w1.astype(jnp.bfloat16), b1.reshape(1, -1).astype(jnp.float32),
            w2.astype(jnp.bfloat16), b2.reshape(1, -1).astype(jnp.float32),
            w3.astype(jnp.bfloat16), b3.reshape(1, -1).astype(jnp.float32),
            w4.astype(jnp.bfloat16), b4.reshape(1, -1).astype(jnp.float32))


@functools.partial(jax.jit, static_argnames=("input_dim", "num_classes", "tile_b"))
def kdd_simple_nn_forward(x, prepared_params, *, input_dim=41, num_classes=23,
                          tile_b=None):
    """x: [batch, input_dim] float32. Returns logits [batch, num_classes] float32."""
    w1, b1, w2, b2, w3, b3, w4, b4 = prepared_params
    batch = x.shape[0]

    # Batch tile: multiple of 8 (sublane), capped at 4096 rows.  If the whole batch
    # would otherwise land in <=2 tiles, balance it into exactly 2 tiles so v7x's two
    # TensorCores each get one "parallel" grid step (no cost on single-TC v5e/v6e).
    if tile_b is None:
        tile_b = min(4096, _round_up(max(batch, 1), 8))
        if batch > 8 and batch <= 2 * tile_b:
            tile_b = _round_up(pl.cdiv(batch, 2), 8)
    else:
        tile_b = _round_up(max(int(tile_b), 8), 8)

    grid = (pl.cdiv(batch, tile_b),)

    flops = 2 * batch * (input_dim * H1 + H1 * H2 + H2 * H3 + H3 * num_classes)
    weight_bytes = (2 * (input_dim * H1 + H1 * H2 + H2 * H3 + H3 * num_classes)  # bf16 W
                    + 4 * (H1 + H2 + H3 + num_classes))                          # f32 b
    bytes_accessed = 4 * batch * (input_dim + num_classes) + weight_bytes

    grid_spec = pl.GridSpec(
        grid=grid,
        in_specs=[
            pl.BlockSpec((tile_b, input_dim), lambda i: (i, 0)),      # x (batch-tiled)
            pl.BlockSpec((input_dim, H1),     lambda i: (0, 0)),      # w1 (VMEM-resident)
            pl.BlockSpec((1, H1),             lambda i: (0, 0)),      # b1
            pl.BlockSpec((H1, H2),            lambda i: (0, 0)),      # w2
            pl.BlockSpec((1, H2),             lambda i: (0, 0)),      # b2
            pl.BlockSpec((H2, H3),            lambda i: (0, 0)),      # w3
            pl.BlockSpec((1, H3),             lambda i: (0, 0)),      # b3
            pl.BlockSpec((H3, num_classes),   lambda i: (0, 0)),      # w4
            pl.BlockSpec((1, num_classes),    lambda i: (0, 0)),      # b4
        ],
        out_specs=pl.BlockSpec((tile_b, num_classes), lambda i: (i, 0)),
    )

    out = pl.pallas_call(
        _mlp_kernel,
        out_shape=jax.ShapeDtypeStruct((batch, num_classes), jnp.float32),
        grid_spec=grid_spec,
        compiler_params=pltpu.CompilerParams(
            dimension_semantics=("parallel",),   # independent batch tiles (v7x: 2 TCs)
        ),
        cost_estimate=pl.CostEstimate(
            flops=flops, transcendentals=0, bytes_accessed=bytes_accessed),
    )(x, w1, b1, w2, b2, w3, b3, w4, b4)

    return out


def init_params(key, input_dim=41, num_classes=23):
    """Deterministic parameter init (PyTorch-Linear-like uniform fan-in scaling)."""
    dims = [(input_dim, H1), (H1, H2), (H2, H3), (H3, num_classes)]
    params = []
    for (fan_in, fan_out) in dims:
        key, kw, kb = jax.random.split(key, 3)
        bound = 1.0 / jnp.sqrt(fan_in)
        w = jax.random.uniform(kw, (fan_in, fan_out), jnp.float32, -bound, bound)
        b = jax.random.uniform(kb, (fan_out,), jnp.float32, -bound, bound)
        params.extend([w, b])
    return tuple(params)


def reference_forward_bf16(x, prepared_params):
    """Plain-JAX reference with the SAME bf16-operand / f32-accumulate math."""
    w1, b1, w2, b2, w3, b3, w4, b4 = prepared_params
    h = jnp.maximum(jnp.dot(x.astype(jnp.bfloat16), w1,
                            preferred_element_type=jnp.float32) + b1, 0.0)
    h = jnp.maximum(jnp.dot(h.astype(jnp.bfloat16), w2,
                            preferred_element_type=jnp.float32) + b2, 0.0)
    h = jnp.maximum(jnp.dot(h.astype(jnp.bfloat16), w3,
                            preferred_element_type=jnp.float32) + b3, 0.0)
    return jnp.dot(h.astype(jnp.bfloat16), w4,
                   preferred_element_type=jnp.float32) + b4


def reference_forward_f32(x, params):
    """Full-f32 reference (eval mode: dropout is identity)."""
    w1, b1, w2, b2, w3, b3, w4, b4 = params
    h = jnp.maximum(x @ w1 + b1, 0.0)
    h = jnp.maximum(h @ w2 + b2, 0.0)
    h = jnp.maximum(h @ w3 + b3, 0.0)
    return h @ w4 + b4


if __name__ == "__main__":
    key = jax.random.PRNGKey(0)
    k_params, k_x = jax.random.split(key)

    input_dim, num_classes = 41, 23
    params = init_params(k_params, input_dim, num_classes)
    prepared = prepare_params(params)   # one-time bf16 weight conversion

    # Small shapes: one aligned batch and one ragged batch (exercises the
    # masked last-tile writes and the 2-step "parallel" grid split).
    for batch in (8, 13):
        kx = jax.random.fold_in(k_x, batch)
        x = jax.random.normal(kx, (batch, input_dim), jnp.float32)

        out = kdd_simple_nn_forward(x, prepared, input_dim=input_dim,
                                    num_classes=num_classes)
        out = jax.block_until_ready(out)
        assert out.shape == (batch, num_classes), out.shape

        # Matched-precision check (same bf16 operands, f32 accumulation).
        ref_bf16 = reference_forward_bf16(x, prepared)
        assert jnp.allclose(out, ref_bf16, atol=1e-3, rtol=1e-3), \
            float(jnp.max(jnp.abs(out - ref_bf16)))

        # Loose sanity check against the full-f32 module semantics
        # (difference is only bf16 operand rounding).
        ref_f32 = reference_forward_f32(x, params)
        assert jnp.allclose(out, ref_f32, atol=1e-1, rtol=1e-1), \
            float(jnp.max(jnp.abs(out - ref_f32)))

    print("KERNEL_OK")
</pallas_src>

<mosaic_0001>
module attributes {stable_mosaic.version = 11 : i64} {
  func.func @_mlp_kernel(%arg0: i32, %arg1: memref<8x41xf32, #tpu.memory_space<vmem>>, %arg2: memref<41x128xbf16, #tpu.memory_space<vmem>>, %arg3: memref<1x128xf32, #tpu.memory_space<vmem>>, %arg4: memref<128x64xbf16, #tpu.memory_space<vmem>>, %arg5: memref<1x64xf32, #tpu.memory_space<vmem>>, %arg6: memref<64x32xbf16, #tpu.memory_space<vmem>>, %arg7: memref<1x32xf32, #tpu.memory_space<vmem>>, %arg8: memref<32x23xbf16, #tpu.memory_space<vmem>>, %arg9: memref<1x23xf32, #tpu.memory_space<vmem>>, %arg10: memref<8x23xf32, #tpu.memory_space<vmem>>) attributes {dimension_semantics = [#tpu.dimension_semantics<parallel>], iteration_bounds = array<i64: 1>, scalar_prefetch = 0 : i64, scratch_operands = 0 : i64, tpu.core_type = #tpu.core_type<tc>, window_params = [{transform_indices = @transform_0, window_bounds = array<i64: 8, 41>}, {pipeline_mode = #tpu.pipeline_mode<synchronous>, transform_indices = @transform_1, window_bounds = array<i64: 41, 128>}, {pipeline_mode = #tpu.pipeline_mode<synchronous>, transform_indices = @transform_2, window_bounds = array<i64: 1, 128>}, {pipeline_mode = #tpu.pipeline_mode<synchronous>, transform_indices = @transform_3, window_bounds = array<i64: 128, 64>}, {pipeline_mode = #tpu.pipeline_mode<synchronous>, transform_indices = @transform_4, window_bounds = array<i64: 1, 64>}, {pipeline_mode = #tpu.pipeline_mode<synchronous>, transform_indices = @transform_5, window_bounds = array<i64: 64, 32>}, {pipeline_mode = #tpu.pipeline_mode<synchronous>, transform_indices = @transform_6, window_bounds = array<i64: 1, 32>}, {pipeline_mode = #tpu.pipeline_mode<synchronous>, transform_indices = @transform_7, window_bounds = array<i64: 32, 23>}, {pipeline_mode = #tpu.pipeline_mode<synchronous>, transform_indices = @transform_8, window_bounds = array<i64: 1, 23>}, {transform_indices = @transform_9, window_bounds = array<i64: 8, 23>}]} {
    %c0 = arith.constant 0 : index
    %c0_0 = arith.constant 0 : index
    %0 = vector.load %arg1[%c0, %c0_0] : memref<8x41xf32, #tpu.memory_space<vmem>>, vector<8x41xf32>
    %1 = arith.truncf %0 : vector<8x41xf32> to vector<8x41xbf16>
    %c0_1 = arith.constant 0 : index
    %c0_2 = arith.constant 0 : index
    %2 = vector.load %arg2[%c0_1, %c0_2] : memref<41x128xbf16, #tpu.memory_space<vmem>>, vector<41x128xbf16>
    %cst = arith.constant dense<0.000000e+00> : vector<8x128xf32>
    %3 = tpu.matmul %1, %2, %cst {dimension_numbers = #tpu.dot_dimension_numbers<[1], [0], [0], [1], [0, 0, 1, 1], [], []>} : vector<8x41xbf16>, vector<41x128xbf16>, vector<8x128xf32> -> vector<8x128xf32>
    %c0_3 = arith.constant 0 : index
    %c0_4 = arith.constant 0 : index
    %4 = vector.load %arg3[%c0_3, %c0_4] : memref<1x128xf32, #tpu.memory_space<vmem>>, vector<1x128xf32>
    %5 = vector.broadcast %4 : vector<1x128xf32> to vector<8x128xf32>
    %6 = arith.addf %3, %5 : vector<8x128xf32>
    %cst_5 = arith.constant 0.000000e+00 : f32
    %7 = vector.broadcast %cst_5 : f32 to vector<8x128xf32>
    %8 = arith.maximumf %6, %7 : vector<8x128xf32>
    %9 = arith.truncf %8 : vector<8x128xf32> to vector<8x128xbf16>
    %c0_6 = arith.constant 0 : index
    %c0_7 = arith.constant 0 : index
    %10 = vector.load %arg4[%c0_6, %c0_7] : memref<128x64xbf16, #tpu.memory_space<vmem>>, vector<128x64xbf16>
    %cst_8 = arith.constant dense<0.000000e+00> : vector<8x64xf32>
    %11 = tpu.matmul %9, %10, %cst_8 {dimension_numbers = #tpu.dot_dimension_numbers<[1], [0], [0], [1], [0, 0, 1, 1], [], []>} : vector<8x128xbf16>, vector<128x64xbf16>, vector<8x64xf32> -> vector<8x64xf32>
    %c0_9 = arith.constant 0 : index
    %c0_10 = arith.constant 0 : index
    %12 = vector.load %arg5[%c0_9, %c0_10] : memref<1x64xf32, #tpu.memory_space<vmem>>, vector<1x64xf32>
    %13 = vector.broadcast %12 : vector<1x64xf32> to vector<8x64xf32>
    %14 = arith.addf %11, %13 : vector<8x64xf32>
    %cst_11 = arith.constant 0.000000e+00 : f32
    %15 = vector.broadcast %cst_11 : f32 to vector<8x64xf32>
    %16 = arith.maximumf %14, %15 : vector<8x64xf32>
    %17 = arith.truncf %16 : vector<8x64xf32> to vector<8x64xbf16>
    %c0_12 = arith.constant 0 : index
    %c0_13 = arith.constant 0 : index
    %18 = vector.load %arg6[%c0_12, %c0_13] : memref<64x32xbf16, #tpu.memory_space<vmem>>, vector<64x32xbf16>
    %cst_14 = arith.constant dense<0.000000e+00> : vector<8x32xf32>
    %19 = tpu.matmul %17, %18, %cst_14 {dimension_numbers = #tpu.dot_dimension_numbers<[1], [0], [0], [1], [0, 0, 1, 1], [], []>} : vector<8x64xbf16>, vector<64x32xbf16>, vector<8x32xf32> -> vector<8x32xf32>
    %c0_15 = arith.constant 0 : index
    %c0_16 = arith.constant 0 : index
    %20 = vector.load %arg7[%c0_15, %c0_16] : memref<1x32xf32, #tpu.memory_space<vmem>>, vector<1x32xf32>
    %21 = vector.broadcast %20 : vector<1x32xf32> to vector<8x32xf32>
    %22 = arith.addf %19, %21 : vector<8x32xf32>
    %cst_17 = arith.constant 0.000000e+00 : f32
    %23 = vector.broadcast %cst_17 : f32 to vector<8x32xf32>
    %24 = arith.maximumf %22, %23 : vector<8x32xf32>
    %25 = arith.truncf %24 : vector<8x32xf32> to vector<8x32xbf16>
    %c0_18 = arith.constant 0 : index
    %c0_19 = arith.constant 0 : index
    %26 = vector.load %arg8[%c0_18, %c0_19] : memref<32x23xbf16, #tpu.memory_space<vmem>>, vector<32x23xbf16>
    %cst_20 = arith.constant dense<0.000000e+00> : vector<8x23xf32>
    %27 = tpu.matmul %25, %26, %cst_20 {dimension_numbers = #tpu.dot_dimension_numbers<[1], [0], [0], [1], [0, 0, 1, 1], [], []>} : vector<8x32xbf16>, vector<32x23xbf16>, vector<8x23xf32> -> vector<8x23xf32>
    %c0_21 = arith.constant 0 : index
    %c0_22 = arith.constant 0 : index
    %28 = vector.load %arg9[%c0_21, %c0_22] : memref<1x23xf32, #tpu.memory_space<vmem>>, vector<1x23xf32>
    %29 = vector.broadcast %28 : vector<1x23xf32> to vector<8x23xf32>
    %30 = arith.addf %27, %29 : vector<8x23xf32>
    %c0_23 = arith.constant 0 : index
    %c0_24 = arith.constant 0 : index
    %31 = vector.load %arg10[%c0_23, %c0_24] : memref<8x23xf32, #tpu.memory_space<vmem>>, vector<8x23xf32>
    tpu.vector_store %arg10[%c0_23, %c0_24], %30 {strides = array<i32>} : memref<8x23xf32, #tpu.memory_space<vmem>>, vector<8x23xf32>,
    return
  }
  func.func @transform_0(%arg0: i32) -> (i32, i32) {
    %c0_i32 = arith.constant 0 : i32
    %c0_i32_0 = arith.constant 0 : i32
    return %arg0, %c0_i32 : i32, i32
  }
  func.func @transform_1(%arg0: i32) -> (i32, i32) {
    %c0_i32 = arith.constant 0 : i32
    %c0_i32_0 = arith.constant 0 : i32
    %c0_i32_1 = arith.constant 0 : i32
    return %c0_i32, %c0_i32_0 : i32, i32
  }
  func.func @transform_2(%arg0: i32) -> (i32, i32) {
    %c0_i32 = arith.constant 0 : i32
    %c0_i32_0 = arith.constant 0 : i32
    %c0_i32_1 = arith.constant 0 : i32
    return %c0_i32, %c0_i32_0 : i32, i32
  }
  func.func @transform_3(%arg0: i32) -> (i32, i32) {
    %c0_i32 = arith.constant 0 : i32
    %c0_i32_0 = arith.constant 0 : i32
    %c0_i32_1 = arith.constant 0 : i32
    return %c0_i32, %c0_i32_0 : i32, i32
  }
  func.func @transform_4(%arg0: i32) -> (i32, i32) {
    %c0_i32 = arith.constant 0 : i32
    %c0_i32_0 = arith.constant 0 : i32
    %c0_i32_1 = arith.constant 0 : i32
    return %c0_i32, %c0_i32_0 : i32, i32
  }
  func.func @transform_5(%arg0: i32) -> (i32, i32) {
    %c0_i32 = arith.constant 0 : i32
    %c0_i32_0 = arith.constant 0 : i32
    %c0_i32_1 = arith.constant 0 : i32
    return %c0_i32, %c0_i32_0 : i32, i32
  }
  func.func @transform_6(%arg0: i32) -> (i32, i32) {
    %c0_i32 = arith.constant 0 : i32
    %c0_i32_0 = arith.constant 0 : i32
    %c0_i32_1 = arith.constant 0 : i32
    return %c0_i32, %c0_i32_0 : i32, i32
  }
  func.func @transform_7(%arg0: i32) -> (i32, i32) {
    %c0_i32 = arith.constant 0 : i32
    %c0_i32_0 = arith.constant 0 : i32
    %c0_i32_1 = arith.constant 0 : i32
    return %c0_i32, %c0_i32_0 : i32, i32
  }
  func.func @transform_8(%arg0: i32) -> (i32, i32) {
    %c0_i32 = arith.constant 0 : i32
    %c0_i32_0 = arith.constant 0 : i32
    %c0_i32_1 = arith.constant 0 : i32
    return %c0_i32, %c0_i32_0 : i32, i32
  }
  func.func @transform_9(%arg0: i32) -> (i32, i32) {
    %c0_i32 = arith.constant 0 : i32
    %c0_i32_0 = arith.constant 0 : i32
    return %arg0, %c0_i32 : i32, i32
  }
}

</mosaic_0001>

<llo_original>
// kernel: kdd_simple_nn_forward.1
$region0: #{kdd_simple_nn_forward.1}
  #allocation0 [shape = 'u32[]', space=smem, size = 0x4, offset = 0x4, fixed_abs, tag = 'smem constant byte address 0x4 - core index']
  #allocation1 [shape = 'u32[144,128]{1,0:T(1,128)}', space=vmem, size = 0x12000, scoped, tag = 'internal scratch']
  %s0 = inlined_call_operand.vmem [shape: f32[8,41], index: 0, kind: input, shape index: {}]
  %s1 = inlined_call_operand.vmem [shape: bf16[41,128], index: 1, kind: input, shape index: {}]
  %s2 = inlined_call_operand.vmem [shape: f32[1,128], index: 2, kind: input, shape index: {}]
  %s3 = inlined_call_operand.vmem [shape: bf16[128,64], index: 3, kind: input, shape index: {}]
  %s4 = inlined_call_operand.vmem [shape: f32[1,64], index: 4, kind: input, shape index: {}]
  %s5 = inlined_call_operand.vmem [shape: bf16[64,32], index: 5, kind: input, shape index: {}]
  %s6 = inlined_call_operand.vmem [shape: f32[1,32], index: 6, kind: input, shape index: {}]
  %s7 = inlined_call_operand.vmem [shape: bf16[32,23], index: 7, kind: input, shape index: {}]
  %s8 = inlined_call_operand.vmem [shape: f32[1,23], index: 8, kind: input, shape index: {}]
  %s9 = inlined_call_operand.hbm [shape: f32[8,23], index: 9, kind: output, shape index: {}]
  %s10 = sld [smem:[#allocation0]]
  $region46: #{kdd_simple_nn_forward.1} parent=0
    _
  %s12 = ssub.s32 1, %s10
  %s13 = scalar_select 0, %s12, %s10
  $region1: #{kdd_simple_nn_forward.1} parent=0
    #allocation2 [shape = 'u8[4096]{0}', space=vmem, size = 0x1000, scoped, tag = 'output window, operand 0, single buffered']
    #allocation3 [shape = 's32[1]{0}', space=sflag, size = 0x4, scoped, tag = 'scoped memory for kdd_simple_nn_forward.1']
    %14 = vsyncpa [#allocation3], 0
    // Predicated region
    $region2: #{kdd_simple_nn_forward.1} parent=1 // pred_check
      _
    $region3: #{kdd_simple_nn_forward.1} parent=1 // pred_check_branch
      %16 = sbr.rel (0) target = $region5
    $region4: #{kdd_simple_nn_forward.1} parent=1 // pred_region
      _
    $region5: #{kdd_simple_nn_forward.1} parent=1 // pred_fallthru
      _
    // Predicated region
    $region6: #{kdd_simple_nn_forward.1} parent=1 // pred_check
      _
    $region7: #{kdd_simple_nn_forward.1} parent=1 // pred_check_branch
      %18 = sbr.rel (0) target = $region9
    $region8: #{kdd_simple_nn_forward.1} parent=1 // pred_region
      _
    $region9: #{kdd_simple_nn_forward.1} parent=1 // pred_fallthru
      _
    // Predicated region
    $region10: #{kdd_simple_nn_forward.1} parent=1 // pred_check
      _
    $region11: #{kdd_simple_nn_forward.1} parent=1 // pred_check_branch
      %20 = sbr.rel (0) target = $region13
    $region12: #{kdd_simple_nn_forward.1} parent=1 // pred_region
      _
    $region13: #{kdd_simple_nn_forward.1} parent=1 // pred_fallthru
      _
    // Predicated region
    $region14: #{kdd_simple_nn_forward.1} parent=1 // pred_check
      _
    $region15: #{kdd_simple_nn_forward.1} parent=1 // pred_check_branch
      %22 = sbr.rel (0) target = $region17
    $region16: #{kdd_simple_nn_forward.1} parent=1 // pred_region
      _
    $region17: #{kdd_simple_nn_forward.1} parent=1 // pred_fallthru
      _
    // Predicated region
    $region18: #{kdd_simple_nn_forward.1} parent=1 // pred_check
      _
    $region19: #{kdd_simple_nn_forward.1} parent=1 // pred_check_branch
      %24 = sbr.rel (0) target = $region21
    $region20: #{kdd_simple_nn_forward.1} parent=1 // pred_region
      _
    $region21: #{kdd_simple_nn_forward.1} parent=1 // pred_fallthru
      _
    // Predicated region
    $region22: #{kdd_simple_nn_forward.1} parent=1 // pred_check
      _
    $region23: #{kdd_simple_nn_forward.1} parent=1 // pred_check_branch
      %26 = sbr.rel (0) target = $region25
    $region24: #{kdd_simple_nn_forward.1} parent=1 // pred_region
      _
    $region25: #{kdd_simple_nn_forward.1} parent=1 // pred_fallthru
      _
    // Predicated region
    $region26: #{kdd_simple_nn_forward.1} parent=1 // pred_check
      _
    $region27: #{kdd_simple_nn_forward.1} parent=1 // pred_check_branch
      %28 = sbr.rel (0) target = $region29
    $region28: #{kdd_simple_nn_forward.1} parent=1 // pred_region
      _
    $region29: #{kdd_simple_nn_forward.1} parent=1 // pred_fallthru
      _
    // Predicated region
    $region30: #{kdd_simple_nn_forward.1} parent=1 // pred_check
      _
    $region31: #{kdd_simple_nn_forward.1} parent=1 // pred_check_branch
      %30 = sbr.rel (0) target = $region33
    $region32: #{kdd_simple_nn_forward.1} parent=1 // pred_region
      _
    $region33: #{kdd_simple_nn_forward.1} parent=1 // pred_fallthru
      _
    // Predicated region
    $region34: #{kdd_simple_nn_forward.1} parent=1 // pred_check
      _
    $region35: #{kdd_simple_nn_forward.1} parent=1 // pred_check_branch
      %32 = sbr.rel (0) target = $region37
    $region36: #{kdd_simple_nn_forward.1} parent=1 // pred_region
      _
    $region37: #{kdd_simple_nn_forward.1} parent=1 // pred_fallthru
      _
    %v34 = vld [vmem:[%s0] sm:$0xff]
    %v35 = vpack.c.bf16 %v34, %v34
    %v36 = vld [vmem:[%s1] sm:$0xf]
    %v37 = vld [vmem:[%s1 + $0x4] sm:$0xf]
    %v38 = vld [vmem:[%s1 + $0x8] sm:$0xf]
    %v39 = vld [vmem:[%s1 + $0xc] sm:$0xf]
    %v40 = vld [vmem:[%s1 + $0x10] sm:$0xf]
    %v41 = vld [vmem:[%s1 + $0x14] sm:$0x1]
    %v42 = vld [vmem:[%s2] sm:$0x1]
    %v44 = vlaneseq
    %v45 = vshrl.u32 %v44, 7
    %v46 = vsub.s32 0, %v45
    %v47 = vrot.slane %v42, %v46
    %v55 = vunpack.c.l.b16 %v36
    %v56 = vunpack.c.l.b16 %v37
    %v57 = vunpack.c.l.b16 %v38
    %v58 = vunpack.c.l.b16 %v39
    %v59 = vunpack.c.l.b16 %v40
    %v60 = vunpack.c.l.b16 %v41
    %v61 = vpack.c.b16 %v56, %v55
    %v62 = vpack.c.b16 %v58, %v57
    %v63 = vpack.c.b16 %v60, %v59
    %vm66 = vcmask 334848
    %v68 = vsel %vm66, %v35, 0
    %vm70 = vcmask 1043456
    %vm71 = vcmask 1044480
    %v72 = vsel %vm70, 4294967295, 65535
    %v73 = vsel %vm71, %v72, 0
    %v75 = vand.u32 %v63, %v73
    %77 = vmatprep.subr.bf16.mxu0 0
    %78 = vmatpush1.bf16.msra.mxu0 0
    %79 = vmatprep.subr.bf16.mxu0 0
    %80 = vmatpush1.bf16.msra.mxu0 0
    %81 = vmatprep.subr.bf16.mxu0 0
    %82 = vmatpush1.bf16.msra.mxu0 0
    %83 = vmatprep.subr.bf16.mxu0 0
    %84 = vmatpush1.bf16.msra.mxu0 0
    %85 = vmatprep.subr.bf16.mxu0 0
    %86 = vmatpush1.bf16.msra.mxu0 0
    %87 = vmatprep.subr.bf16.mxu0 0
    %88 = vmatpush1.bf16.msra.mxu0 %v75
    %89 = vmatprep.subr.bf16.mxu0 0
    %90 = vmatpush1.bf16.msra.mxu0 %v62
    %91 = vmatprep.subr.bf16.mxu0 0
    %92 = vmatpush1.bf16.msra.mxu0 %v61
    %93 = vmatprep.subr.bf16.mxu0 0
    %94 = vmatpush2.bf16.msra.mxu0 0
    %95 = vmatprep.subr.bf16.mxu0 0
    %96 = vmatpush2.bf16.msra.mxu0 0
    %97 = vmatprep.subr.bf16.mxu0 0
    %98 = vmatpush2.bf16.msra.mxu0 0
    %99 = vmatprep.subr.bf16.mxu0 0
    %100 = vmatpush2.bf16.msra.mxu0 0
    %101 = vmatprep.subr.bf16.mxu0 0
    %102 = vmatpush2.bf16.msra.mxu0 0
    %103 = vmatprep.subr.bf16.mxu0 0
    %104 = vmatpush2.bf16.msra.mxu0 0
    %105 = vmatprep.subr.bf16.mxu0 0
    %106 = vmatpush2.bf16.msra.mxu0 0
    %107 = vmatprep.subr.bf16.mxu0 0
    %108 = vmatpush2.bf16.msra.mxu0 0
    %109 = vmatprep.mubr.bf16.mxu0 0
    %110 = vmatmul.mubr.bf16.gmra.mxu0 %v68
    %v111 = vpop.f32.mrf.mxu0
    %v112 = vadd.f32 %v47, %v111
    %v113 = vpop.f32.mrf.mxu0
    %v114 = vpop.f32.mrf.mxu0
    %v115 = vpop.f32.mrf.mxu0
    %116 = vdwg.mxu0
    %v117 = vmax.f32 %v112, 0.0
    %v118 = vpack.c.bf16 %v117, %v117
    %v119 = vld [vmem:[%s3] sm:$0xf]
    %v120 = vld [vmem:[%s3 + $0x4] sm:$0xf]
    %v121 = vld [vmem:[%s3 + $0x8] sm:$0xf]
    %v122 = vld [vmem:[%s3 + $0xc] sm:$0xf]
    %v123 = vld [vmem:[%s3 + $0x10] sm:$0xf]
    %v124 = vld [vmem:[%s3 + $0x14] sm:$0xf]
    %v125 = vld [vmem:[%s3 + $0x18] sm:$0xf]
    %v126 = vld [vmem:[%s3 + $0x1c] sm:$0xf]
    %v127 = vld [vmem:[%s3 + $0x20] sm:$0xf]
    %v128 = vld [vmem:[%s3 + $0x24] sm:$0xf]
    %v129 = vld [vmem:[%s3 + $0x28] sm:$0xf]
    %v130 = vld [vmem:[%s3 + $0x2c] sm:$0xf]
    %v131 = vld [vmem:[%s3 + $0x30] sm:$0xf]
    %v132 = vld [vmem:[%s3 + $0x34] sm:$0xf]
    %v133 = vld [vmem:[%s3 + $0x38] sm:$0xf]
    %v134 = vld [vmem:[%s3 + $0x3c] sm:$0xf]
    %v135 = vld [vmem:[%s4] sm:$0x1]
    %v137 = vlaneseq
    %v138 = vshrl.u32 %v137, 7
    %v139 = vsub.s32 0, %v138
    %v140 = vrot.slane %v135, %v139
    %v158 = vunpack.c.l.b16 %v119
    %v159 = vunpack.c.l.b16 %v120
    %v160 = vunpack.c.l.b16 %v121
    %v161 = vunpack.c.l.b16 %v122
    %v162 = vunpack.c.l.b16 %v123
    %v163 = vunpack.c.l.b16 %v124
    %v164 = vunpack.c.l.b16 %v125
    %v165 = vunpack.c.l.b16 %v126
    %v166 = vunpack.c.l.b16 %v127
    %v167 = vunpack.c.l.b16 %v128
    %v168 = vunpack.c.l.b16 %v129
    %v169 = vunpack.c.l.b16 %v130
    %v170 = vunpack.c.l.b16 %v131
    %v171 = vunpack.c.l.b16 %v132
    %v172 = vunpack.c.l.b16 %v133
    %v173 = vunpack.c.l.b16 %v134
    %v174 = vpack.c.b16 %v159, %v158
    %v175 = vpack.c.b16 %v161, %v160
    %v176 = vpack.c.b16 %v163, %v162
    %v177 = vpack.c.b16 %v165, %v164
    %v178 = vpack.c.b16 %v167, %v166
    %v179 = vpack.c.b16 %v169, %v168
    %v180 = vpack.c.b16 %v171, %v170
    %v181 = vpack.c.b16 %v173, %v172
    %190 = vmatprep.subr.bf16.mxu0 0
    %191 = vmatpush1.bf16.msra.mxu0 %v181
    %192 = vmatprep.subr.bf16.mxu0 0
    %193 = vmatpush1.bf16.msra.mxu0 %v180
    %194 = vmatprep.subr.bf16.mxu0 0
    %195 = vmatpush1.bf16.msra.mxu0 %v179
    %196 = vmatprep.subr.bf16.mxu0 0
    %197 = vmatpush1.bf16.msra.mxu0 %v178
    %198 = vmatprep.subr.bf16.mxu0 0
    %199 = vmatpush1.bf16.msra.mxu0 %v177
    %200 = vmatprep.subr.bf16.mxu0 0
    %201 = vmatpush1.bf16.msra.mxu0 %v176
    %202 = vmatprep.subr.bf16.mxu0 0
    %203 = vmatpush1.bf16.msra.mxu0 %v175
    %204 = vmatprep.subr.bf16.mxu0 0
    %205 = vmatpush1.bf16.msra.mxu0 %v174
    %206 = vmatprep.subr.bf16.mxu0 0
    %207 = vmatpush2.bf16.msra.mxu0 0
    %208 = vmatprep.subr.bf16.mxu0 0
    %209 = vmatpush2.bf16.msra.mxu0 0
    %210 = vmatprep.subr.bf16.mxu0 0
    %211 = vmatpush2.bf16.msra.mxu0 0
    %212 = vmatprep.subr.bf16.mxu0 0
    %213 = vmatpush2.bf16.msra.mxu0 0
    %214 = vmatprep.subr.bf16.mxu0 0
    %215 = vmatpush2.bf16.msra.mxu0 0
    %216 = vmatprep.subr.bf16.mxu0 0
    %217 = vmatpush2.bf16.msra.mxu0 0
    %218 = vmatprep.subr.bf16.mxu0 0
    %219 = vmatpush2.bf16.msra.mxu0 0
    %220 = vmatprep.subr.bf16.mxu0 0
    %221 = vmatpush2.bf16.msra.mxu0 0
    %222 = vmatprep.mubr.bf16.mxu0 0
    %223 = vmatmul.mubr.bf16.gmra.mxu0 %v118
    %v224 = vpop.f32.mrf.mxu0
    %v225 = vadd.f32 %v140, %v224
    %v226 = vpop.f32.mrf.mxu0
    %v227 = vpop.f32.mrf.mxu0
    %v228 = vpop.f32.mrf.mxu0
    %229 = vdwg.mxu0
    %v230 = vmax.f32 %v225, 0.0
    %v231 = vpack.c.bf16 %v230, %v230
    %v232 = vld [vmem:[%s5] sm:$0xf]
    %v233 = vld [vmem:[%s5 + $0x4] sm:$0xf]
    %v234 = vld [vmem:[%s5 + $0x8] sm:$0xf]
    %v235 = vld [vmem:[%s5 + $0xc] sm:$0xf]
    %v236 = vld [vmem:[%s5 + $0x10] sm:$0xf]
    %v237 = vld [vmem:[%s5 + $0x14] sm:$0xf]
    %v238 = vld [vmem:[%s5 + $0x18] sm:$0xf]
    %v239 = vld [vmem:[%s5 + $0x1c] sm:$0xf]
    %v240 = vld [vmem:[%s6] sm:$0x1]
    %v242 = vlaneseq
    %v243 = vshrl.u32 %v242, 7
    %v244 = vsub.s32 0, %v243
    %v245 = vrot.slane %v240, %v244
    %v255 = vunpack.c.l.b16 %v232
    %v256 = vunpack.c.l.b16 %v233
    %v257 = vunpack.c.l.b16 %v234
    %v258 = vunpack.c.l.b16 %v235
    %v259 = vunpack.c.l.b16 %v236
    %v260 = vunpack.c.l.b16 %v237
    %v261 = vunpack.c.l.b16 %v238
    %v262 = vunpack.c.l.b16 %v239
    %v263 = vpack.c.b16 %v256, %v255
    %v264 = vpack.c.b16 %v258, %v257
    %v265 = vpack.c.b16 %v260, %v259
    %v266 = vpack.c.b16 %v262, %v261
    %vm271 = vcmask 523264
    %v273 = vsel %vm271, %v231, 0
    %275 = vmatprep.subr.bf16.mxu0 0
    %276 = vmatpush1.bf16.msra.mxu0 0
    %277 = vmatprep.subr.bf16.mxu0 0
    %278 = vmatpush1.bf16.msra.mxu0 0
    %279 = vmatprep.subr.bf16.mxu0 0
    %280 = vmatpush1.bf16.msra.mxu0 0
    %281 = vmatprep.subr.bf16.mxu0 0
    %282 = vmatpush1.bf16.msra.mxu0 0
    %283 = vmatprep.subr.bf16.mxu0 0
    %284 = vmatpush1.bf16.msra.mxu0 %v266
    %285 = vmatprep.subr.bf16.mxu0 0
    %286 = vmatpush1.bf16.msra.mxu0 %v265
    %287 = vmatprep.subr.bf16.mxu0 0
    %288 = vmatpush1.bf16.msra.mxu0 %v264
    %289 = vmatprep.subr.bf16.mxu0 0
    %290 = vmatpush1.bf16.msra.mxu0 %v263
    %291 = vmatprep.subr.bf16.mxu0 0
    %292 = vmatpush2.bf16.msra.mxu0 0
    %293 = vmatprep.subr.bf16.mxu0 0
    %294 = vmatpush2.bf16.msra.mxu0 0
    %295 = vmatprep.subr.bf16.mxu0 0
    %296 = vmatpush2.bf16.msra.mxu0 0
    %297 = vmatprep.subr.bf16.mxu0 0
    %298 = vmatpush2.bf16.msra.mxu0 0
    %299 = vmatprep.subr.bf16.mxu0 0
    %300 = vmatpush2.bf16.msra.mxu0 0
    %301 = vmatprep.subr.bf16.mxu0 0
    %302 = vmatpush2.bf16.msra.mxu0 0
    %303 = vmatprep.subr.bf16.mxu0 0
    %304 = vmatpush2.bf16.msra.mxu0 0
    %305 = vmatprep.subr.bf16.mxu0 0
    %306 = vmatpush2.bf16.msra.mxu0 0
    %307 = vmatprep.mubr.bf16.mxu0 0
    %308 = vmatmul.mubr.bf16.gmra.mxu0 %v273
    %v309 = vpop.f32.mrf.mxu0
    %v310 = vadd.f32 %v245, %v309
    %v311 = vpop.f32.mrf.mxu0
    %v312 = vpop.f32.mrf.mxu0
    %v313 = vpop.f32.mrf.mxu0
    %314 = vdwg.mxu0
    %v315 = vmax.f32 %v310, 0.0
    %v316 = vpack.c.bf16 %v315, %v315
    %v317 = vld [vmem:[%s7] sm:$0xf]
    %v318 = vld [vmem:[%s7 + $0x4] sm:$0xf]
    %v319 = vld [vmem:[%s7 + $0x8] sm:$0xf]
    %v320 = vld [vmem:[%s7 + $0xc] sm:$0xf]
    %v321 = vld [vmem:[%s8] sm:$0x1]
    %v323 = vlaneseq
    %v324 = vshrl.u32 %v323, 7
    %v325 = vsub.s32 0, %v324
    %v326 = vrot.slane %v321, %v325
    %v332 = vunpack.c.l.b16 %v317
    %v333 = vunpack.c.l.b16 %v318
    %v334 = vunpack.c.l.b16 %v319
    %v335 = vunpack.c.l.b16 %v320
    %v336 = vpack.c.b16 %v333, %v332
    %v337 = vpack.c.b16 %v335, %v334
    %vm340 = vcmask 261120
    %v342 = vsel %vm340, %v316, 0
    %344 = vmatprep.subr.bf16.mxu0 0
    %345 = vmatpush1.bf16.msra.mxu0 0
    %346 = vmatprep.subr.bf16.mxu0 0
    %347 = vmatpush1.bf16.msra.mxu0 0
    %348 = vmatprep.subr.bf16.mxu0 0
    %349 = vmatpush1.bf16.msra.mxu0 0
    %350 = vmatprep.subr.bf16.mxu0 0
    %351 = vmatpush1.bf16.msra.mxu0 0
    %352 = vmatprep.subr.bf16.mxu0 0
    %353 = vmatpush1.bf16.msra.mxu0 0
    %354 = vmatprep.subr.bf16.mxu0 0
    %355 = vmatpush1.bf16.msra.mxu0 0
    %356 = vmatprep.subr.bf16.mxu0 0
    %357 = vmatpush1.bf16.msra.mxu0 %v337
    %358 = vmatprep.subr.bf16.mxu0 0
    %359 = vmatpush1.bf16.msra.mxu0 %v336
    %360 = vmatprep.subr.bf16.mxu0 0
    %361 = vmatpush2.bf16.msra.mxu0 0
    %362 = vmatprep.subr.bf16.mxu0 0
    %363 = vmatpush2.bf16.msra.mxu0 0
    %364 = vmatprep.subr.bf16.mxu0 0
    %365 = vmatpush2.bf16.msra.mxu0 0
    %366 = vmatprep.subr.bf16.mxu0 0
    %367 = vmatpush2.bf16.msra.mxu0 0
    %368 = vmatprep.subr.bf16.mxu0 0
    %369 = vmatpush2.bf16.msra.mxu0 0
    %370 = vmatprep.subr.bf16.mxu0 0
    %371 = vmatpush2.bf16.msra.mxu0 0
    %372 = vmatprep.subr.bf16.mxu0 0
    %373 = vmatpush2.bf16.msra.mxu0 0
    %374 = vmatprep.subr.bf16.mxu0 0
    %375 = vmatpush2.bf16.msra.mxu0 0
    %376 = vmatprep.mubr.bf16.mxu0 0
    %377 = vmatmul.mubr.bf16.gmra.mxu0 %v342
    %v378 = vpop.f32.mrf.mxu0
    %v379 = vadd.f32 %v326, %v378
    %v380 = vpop.f32.mrf.mxu0
    %v381 = vpop.f32.mrf.mxu0
    %v382 = vpop.f32.mrf.mxu0
    %383 = vdwg.mxu0
    %vm384 = vcmask 187392
    %385 = vst.msk [vmem:[#allocation2] sm:$0xff] %vm384, %v379
    // Predicated region
    $region38: #{kdd_simple_nn_forward.1} parent=1 // pred_check
      _
    $region39: #{kdd_simple_nn_forward.1} parent=1 // pred_check_branch
      %387 = sbr.rel (0) target = $region41
    $region40: #{kdd_simple_nn_forward.1} parent=1 // pred_region
      %s389 = ssub.s32 128, 128
      %390 = vsyncadd [#allocation3], %s389
      %s392 = sshll.u32 [#allocation2], 4
      %s393 = int_to_ptr.vmem [resolvable:$true] %s392
      %395 = dma.vmem_to_hbm [thread:$0]  %s393, 128, %s9, [#allocation3]
    $region41: #{kdd_simple_nn_forward.1} parent=1 // pred_fallthru
      _
    // Predicated region
    $region42: #{kdd_simple_nn_forward.1} parent=1 // pred_check
      _
    $region43: #{kdd_simple_nn_forward.1} parent=1 // pred_check_branch
      %397 = sbr.rel (0) target = $region45
    $region44: #{kdd_simple_nn_forward.1} parent=1 // pred_region
      %398 = dma.done [#allocation3], 128
    $region45: #{kdd_simple_nn_forward.1} parent=1 // pred_fallthru
      _
    %399 = vsyncpa [#allocation3], 1

</llo_original>
